<compile_context>
chip_gen: v7x
topology: tpu7x:2x2x1
jax: 0.10.0
libtpu: 0.0.40
codegen_flags: <defaults>
</compile_context>

<pallas_src>
import jax
import jax.numpy as jnp
from jax.experimental import pallas as pl
from jax.experimental.pallas import tpu as pltpu


def _round_up(n, m):
    return ((n + m - 1) // m) * m


def discrim_kernel(x_ref, w1_ref, b1_ref, w2_ref, b2_ref, w3_ref, b3_ref, o_ref):
    """One batch tile, feature-major: x_ref (3, TB) -> o_ref (1, TB)."""
    x = x_ref[...]                                          # (3, TB)  f32
    w1 = w1_ref[...]                                        # (64, 3)  f32

    # ---- fc1 (K = 3): three VPU broadcast-FMAs, no MXU push needed --------
    h = (w1[:, 0:1] * x[0:1, :]
         + w1[:, 1:2] * x[1:2, :]
         + w1[:, 2:3] * x[2:3, :]
         + b1_ref[...])                                     # (64, TB) f32
    h = jnp.maximum(h, 0.01 * h)                            # LeakyReLU(0.01)

    # ---- fc2: 64x64 MXU matmul, bf16 inputs / f32 accumulate --------------
    h = jnp.dot(w2_ref[...].astype(jnp.bfloat16), h.astype(jnp.bfloat16),
                preferred_element_type=jnp.float32) + b2_ref[...]
    h = jnp.maximum(h, 0.01 * h)                            # LeakyReLU(0.01)

    # ---- fc3: 1x64 MXU matmul, bias read from SMEM scalar ------------------
    z = jnp.dot(w3_ref[...].astype(jnp.bfloat16), h.astype(jnp.bfloat16),
                preferred_element_type=jnp.float32) + b3_ref[0]   # (1, TB)

    # Sigmoid: divide goes to the EUP slot via approximate reciprocal.
    o_ref[...] = pl.reciprocal(1.0 + jnp.exp(-z), approx=True)


def discrim_forward(x, params, *, tb=2048):
    """x: (B, 3) float32 -> (B, 1) float32."""
    w1, b1, w2, b2, w3, b3 = params
    B = x.shape[0]
    TB = min(tb, _round_up(max(B, 1), 128))       # lane-multiple batch tile
    Bp = _round_up(B, TB)

    # Feature-major, batch padded up to a tile multiple (padding sliced off below).
    xt = jnp.zeros((3, Bp), jnp.float32).at[:, :B].set(x.T.astype(jnp.float32))

    const = lambda a: pl.BlockSpec(a.shape, lambda i, _nd=a.ndim: (0,) * _nd)

    out = pl.pallas_call(
        discrim_kernel,
        out_shape=jax.ShapeDtypeStruct((1, Bp), jnp.float32),
        grid=(Bp // TB,),
        in_specs=[
            pl.BlockSpec((3, TB), lambda i: (0, i)),              # x tile
            const(w1), const(b1), const(w2), const(b2), const(w3),
            pl.BlockSpec(memory_space=pltpu.MemorySpace.SMEM),    # b3 scalar
        ],
        out_specs=pl.BlockSpec((1, TB), lambda i: (0, i)),
        compiler_params=pltpu.CompilerParams(
            dimension_semantics=("parallel",)),
    )(xt, w1, b1, w2, b2, w3, b3)

    return out[:, :B].T                                            # (B, 1)


def init_params(key):
    # PyTorch nn.Linear default init: U(-1/sqrt(fan_in), 1/sqrt(fan_in)).
    # Weights kept PyTorch-native [out, in]; biases as [out, 1] columns
    # (lane-broadcast in the feature-major kernel); fc3 bias as a (1,) scalar.
    def linear(k, fan_in, fan_out):
        kw, kb = jax.random.split(k)
        bound = 1.0 / jnp.sqrt(float(fan_in))
        w = jax.random.uniform(kw, (fan_out, fan_in), jnp.float32, -bound, bound)
        b = jax.random.uniform(kb, (fan_out, 1), jnp.float32, -bound, bound)
        return w, b

    k1, k2, k3 = jax.random.split(key, 3)
    w1, b1 = linear(k1, 3, 64)
    w2, b2 = linear(k2, 64, 64)
    w3, b3 = linear(k3, 64, 1)
    return (w1, b1, w2, b2, w3, b3[:, 0])


def reference_forward(x, params):
    w1, b1, w2, b2, w3, b3 = params
    leaky = lambda v: jnp.where(v > 0, v, 0.01 * v)
    h = leaky(x @ w1.T + b1[:, 0])
    h = leaky(h @ w2.T + b2[:, 0])
    return jax.nn.sigmoid(h @ w3.T + b3)


if __name__ == "__main__":
    key = jax.random.PRNGKey(0)
    kx, kp = jax.random.split(key)

    B = 300                                  # exercises batch padding + 2 grid steps
    x = jax.random.normal(kx, (B, 3), dtype=jnp.float32)
    params = init_params(kp)

    out = jax.block_until_ready(discrim_forward(x, params, tb=256))
    ref = reference_forward(x, params)

    assert out.shape == (B, 1)
    # bf16 MXU inputs + approx reciprocal -> relaxed tolerance vs the f32 reference.
    assert jnp.allclose(out, ref, atol=2e-2, rtol=0.0), \
        float(jnp.max(jnp.abs(out - ref)))

    print("KERNEL_OK")
</pallas_src>

<mosaic_0001>
module attributes {stable_mosaic.version = 11 : i64} {
  func.func @discrim_kernel(%arg0: i32, %arg1: memref<3x256xf32, #tpu.memory_space<vmem>>, %arg2: memref<64x3xf32, #tpu.memory_space<vmem>>, %arg3: memref<64x1xf32, #tpu.memory_space<vmem>>, %arg4: memref<64x64xf32, #tpu.memory_space<vmem>>, %arg5: memref<64x1xf32, #tpu.memory_space<vmem>>, %arg6: memref<1x64xf32, #tpu.memory_space<vmem>>, %arg7: memref<1xf32, #tpu.memory_space<smem>>, %arg8: memref<1x256xf32, #tpu.memory_space<vmem>>) attributes {dimension_semantics = [#tpu.dimension_semantics<parallel>], iteration_bounds = array<i64: 2>, scalar_prefetch = 0 : i64, scratch_operands = 0 : i64, tpu.core_type = #tpu.core_type<tc>, window_params = [{transform_indices = @transform_0, window_bounds = array<i64: 3, 256>}, {pipeline_mode = #tpu.pipeline_mode<synchronous>, transform_indices = @transform_1, window_bounds = array<i64: 64, 3>}, {pipeline_mode = #tpu.pipeline_mode<synchronous>, transform_indices = @transform_2, window_bounds = array<i64: 64, 1>}, {pipeline_mode = #tpu.pipeline_mode<synchronous>, transform_indices = @transform_3, window_bounds = array<i64: 64, 64>}, {pipeline_mode = #tpu.pipeline_mode<synchronous>, transform_indices = @transform_4, window_bounds = array<i64: 64, 1>}, {pipeline_mode = #tpu.pipeline_mode<synchronous>, transform_indices = @transform_5, window_bounds = array<i64: 1, 64>}, {transform_indices = @transform_6, window_bounds = array<i64: 1>}, {transform_indices = @transform_7, window_bounds = array<i64: 1, 256>}]} {
    %c0 = arith.constant 0 : index
    %c0_0 = arith.constant 0 : index
    %0 = vector.load %arg1[%c0, %c0_0] : memref<3x256xf32, #tpu.memory_space<vmem>>, vector<3x256xf32>
    %c0_1 = arith.constant 0 : index
    %c0_2 = arith.constant 0 : index
    %1 = vector.load %arg2[%c0_1, %c0_2] : memref<64x3xf32, #tpu.memory_space<vmem>>, vector<64x3xf32>
    %2 = vector.extract_strided_slice %1 {offsets = [0, 0], sizes = [64, 1], strides = [1, 1]} : vector<64x3xf32> to vector<64x1xf32>
    %3 = vector.extract_strided_slice %0 {offsets = [0, 0], sizes = [1, 256], strides = [1, 1]} : vector<3x256xf32> to vector<1x256xf32>
    %4 = vector.broadcast %2 : vector<64x1xf32> to vector<64x256xf32>
    %5 = vector.broadcast %3 : vector<1x256xf32> to vector<64x256xf32>
    %6 = arith.mulf %4, %5 : vector<64x256xf32>
    %7 = vector.extract_strided_slice %1 {offsets = [0, 1], sizes = [64, 1], strides = [1, 1]} : vector<64x3xf32> to vector<64x1xf32>
    %8 = vector.extract_strided_slice %0 {offsets = [1, 0], sizes = [1, 256], strides = [1, 1]} : vector<3x256xf32> to vector<1x256xf32>
    %9 = vector.broadcast %7 : vector<64x1xf32> to vector<64x256xf32>
    %10 = vector.broadcast %8 : vector<1x256xf32> to vector<64x256xf32>
    %11 = arith.mulf %9, %10 : vector<64x256xf32>
    %12 = arith.addf %6, %11 : vector<64x256xf32>
    %13 = vector.extract_strided_slice %1 {offsets = [0, 2], sizes = [64, 1], strides = [1, 1]} : vector<64x3xf32> to vector<64x1xf32>
    %14 = vector.extract_strided_slice %0 {offsets = [2, 0], sizes = [1, 256], strides = [1, 1]} : vector<3x256xf32> to vector<1x256xf32>
    %15 = vector.broadcast %13 : vector<64x1xf32> to vector<64x256xf32>
    %16 = vector.broadcast %14 : vector<1x256xf32> to vector<64x256xf32>
    %17 = arith.mulf %15, %16 : vector<64x256xf32>
    %18 = arith.addf %12, %17 : vector<64x256xf32>
    %c0_3 = arith.constant 0 : index
    %c0_4 = arith.constant 0 : index
    %19 = vector.load %arg3[%c0_3, %c0_4] : memref<64x1xf32, #tpu.memory_space<vmem>>, vector<64x1xf32>
    %20 = vector.broadcast %19 : vector<64x1xf32> to vector<64x256xf32>
    %21 = arith.addf %18, %20 : vector<64x256xf32>
    %cst = arith.constant 0.00999999977 : f32
    %22 = vector.broadcast %cst : f32 to vector<64x256xf32>
    %23 = arith.mulf %22, %21 : vector<64x256xf32>
    %24 = arith.maximumf %21, %23 : vector<64x256xf32>
    %c0_5 = arith.constant 0 : index
    %c0_6 = arith.constant 0 : index
    %25 = vector.load %arg4[%c0_5, %c0_6] : memref<64x64xf32, #tpu.memory_space<vmem>>, vector<64x64xf32>
    %26 = arith.truncf %25 : vector<64x64xf32> to vector<64x64xbf16>
    %27 = arith.truncf %24 : vector<64x256xf32> to vector<64x256xbf16>
    %cst_7 = arith.constant dense<0.000000e+00> : vector<64x256xf32>
    %28 = tpu.matmul %26, %27, %cst_7 {dimension_numbers = #tpu.dot_dimension_numbers<[1], [0], [0], [1], [0, 0, 1, 1], [], []>} : vector<64x64xbf16>, vector<64x256xbf16>, vector<64x256xf32> -> vector<64x256xf32>
    %c0_8 = arith.constant 0 : index
    %c0_9 = arith.constant 0 : index
    %29 = vector.load %arg5[%c0_8, %c0_9] : memref<64x1xf32, #tpu.memory_space<vmem>>, vector<64x1xf32>
    %30 = vector.broadcast %29 : vector<64x1xf32> to vector<64x256xf32>
    %31 = arith.addf %28, %30 : vector<64x256xf32>
    %cst_10 = arith.constant 0.00999999977 : f32
    %32 = vector.broadcast %cst_10 : f32 to vector<64x256xf32>
    %33 = arith.mulf %32, %31 : vector<64x256xf32>
    %34 = arith.maximumf %31, %33 : vector<64x256xf32>
    %c0_11 = arith.constant 0 : index
    %c0_12 = arith.constant 0 : index
    %35 = vector.load %arg6[%c0_11, %c0_12] : memref<1x64xf32, #tpu.memory_space<vmem>>, vector<1x64xf32>
    %36 = arith.truncf %35 : vector<1x64xf32> to vector<1x64xbf16>
    %37 = arith.truncf %34 : vector<64x256xf32> to vector<64x256xbf16>
    %cst_13 = arith.constant dense<0.000000e+00> : vector<1x256xf32>
    %38 = tpu.matmul %36, %37, %cst_13 {dimension_numbers = #tpu.dot_dimension_numbers<[1], [0], [0], [1], [0, 0, 1, 1], [], []>} : vector<1x64xbf16>, vector<64x256xbf16>, vector<1x256xf32> -> vector<1x256xf32>
    %c0_14 = arith.constant 0 : index
    %39 = memref.load %arg7[%c0_14] : memref<1xf32, #tpu.memory_space<smem>>
    %40 = vector.broadcast %39 : f32 to vector<1x256xf32>
    %41 = arith.addf %38, %40 : vector<1x256xf32>
    %cst_15 = arith.constant 0.000000e+00 : f32
    %42 = vector.broadcast %cst_15 : f32 to vector<1x256xf32>
    %43 = arith.subf %42, %41 : vector<1x256xf32>
    %44 = math.exp %43 : vector<1x256xf32>
    %cst_16 = arith.constant 1.000000e+00 : f32
    %45 = vector.broadcast %cst_16 : f32 to vector<1x256xf32>
    %46 = arith.addf %45, %44 : vector<1x256xf32>
    %47 = tpu.reciprocal %46 {approx = true} : vector<1x256xf32> -> vector<1x256xf32>
    %c0_17 = arith.constant 0 : index
    %c0_18 = arith.constant 0 : index
    %48 = vector.load %arg8[%c0_17, %c0_18] : memref<1x256xf32, #tpu.memory_space<vmem>>, vector<1x256xf32>
    tpu.vector_store %arg8[%c0_17, %c0_18], %47 {strides = array<i32>} : memref<1x256xf32, #tpu.memory_space<vmem>>, vector<1x256xf32>,
    return
  }
  func.func @transform_0(%arg0: i32) -> (i32, i32) {
    %c0_i32 = arith.constant 0 : i32
    %c0_i32_0 = arith.constant 0 : i32
    return %c0_i32, %arg0 : i32, i32
  }
  func.func @transform_1(%arg0: i32) -> (i32, i32) {
    %c0_i32 = arith.constant 0 : i32
    %c0_i32_0 = arith.constant 0 : i32
    %c0_i32_1 = arith.constant 0 : i32
    return %c0_i32, %c0_i32_0 : i32, i32
  }
  func.func @transform_2(%arg0: i32) -> (i32, i32) {
    %c0_i32 = arith.constant 0 : i32
    %c0_i32_0 = arith.constant 0 : i32
    %c0_i32_1 = arith.constant 0 : i32
    return %c0_i32, %c0_i32_0 : i32, i32
  }
  func.func @transform_3(%arg0: i32) -> (i32, i32) {
    %c0_i32 = arith.constant 0 : i32
    %c0_i32_0 = arith.constant 0 : i32
    %c0_i32_1 = arith.constant 0 : i32
    return %c0_i32, %c0_i32_0 : i32, i32
  }
  func.func @transform_4(%arg0: i32) -> (i32, i32) {
    %c0_i32 = arith.constant 0 : i32
    %c0_i32_0 = arith.constant 0 : i32
    %c0_i32_1 = arith.constant 0 : i32
    return %c0_i32, %c0_i32_0 : i32, i32
  }
  func.func @transform_5(%arg0: i32) -> (i32, i32) {
    %c0_i32 = arith.constant 0 : i32
    %c0_i32_0 = arith.constant 0 : i32
    %c0_i32_1 = arith.constant 0 : i32
    return %c0_i32, %c0_i32_0 : i32, i32
  }
  func.func @transform_6(%arg0: i32) -> i32 {
    %c0_i32 = arith.constant 0 : i32
    %c0_i32_0 = arith.constant 0 : i32
    return %c0_i32 : i32
  }
  func.func @transform_7(%arg0: i32) -> (i32, i32) {
    %c0_i32 = arith.constant 0 : i32
    %c0_i32_0 = arith.constant 0 : i32
    return %c0_i32, %arg0 : i32, i32
  }
}

</mosaic_0001>

<llo_original>
// kernel: tpu_custom_call.1
$region0: #{tpu_custom_call.1}
  #allocation0 [shape = 'u32[]', space=smem, size = 0x4, offset = 0x4, fixed_abs, tag = 'smem constant byte address 0x4 - core index']
  #allocation1 [shape = 'u32[144,128]{1,0:T(1,128)}', space=vmem, size = 0x12000, scoped, tag = 'internal scratch']
  #allocation2 [shape = 'f32[1]{0:T(128)S(6)}', space=smem, size = 0x200, scoped, tag = 'scoped memory for tpu_custom_call.1']
  %s0 = inlined_call_operand.vmem [shape: f32[3,512], index: 0, kind: input, shape index: {}]
  %s1 = inlined_call_operand.vmem [shape: f32[64,3], index: 1, kind: input, shape index: {}]
  %s2 = inlined_call_operand.vmem [shape: f32[64,1], index: 2, kind: input, shape index: {}]
  %s3 = inlined_call_operand.vmem [shape: f32[64,64], index: 3, kind: input, shape index: {}]
  %s4 = inlined_call_operand.vmem [shape: f32[64,1], index: 4, kind: input, shape index: {}]
  %s5 = inlined_call_operand.vmem [shape: f32[1,64], index: 5, kind: input, shape index: {}]
  %s6 = inlined_call_operand.<no memory space> [shape: f32[1], index: 6, kind: input, shape index: {}]
  %s7 = inlined_call_operand.hbm [shape: f32[1,512], index: 7, kind: output, shape index: {}]
  %s8 = sld [smem:[#allocation0]]
  $region61: #{tpu_custom_call.1} parent=0
    _
  %s10 = ssub.s32 1, %s8
  %s11 = scalar_select 0, %s10, %s8
  %12 = sst [smem:[#allocation2]] %s6
  $region1: #{tpu_custom_call.1} parent=0
    #allocation3 [shape = 'u8[2048]{0}', space=vmem, size = 0x800, scoped, tag = 'output window, operand 0']
    #allocation4 [shape = 's32[2]{0}', space=sflag, size = 0x8, scoped, tag = 'scoped memory for tpu_custom_call.1']
    %13 = vsyncpa [#allocation4], 0
    %s14 = scalar_lea.sflag [#allocation4], 1
    %15 = vsyncpa %s14, 0
    loop: start=0, step=1, limit=4
    $region2: #{tpu_custom_call.1} parent=1 // loop_pre_header
      _
    $region3: #{tpu_custom_call.1} parent=1 // loop_header
      %s17 = sphi 0, %s21
      %p18 = scmp.ge.s32.totalorder %s17, 4
      %s27 = sphi 0, %s29
      %s30 = sphi 0, %s27
      %s31 = sphi 0, %s30
      %s47 = sphi 0, %s31
      %s51 = sphi 0, %s51
      %s53 = sphi 0, %s51
      %s54 = sphi 0, %s53
      %s68 = sphi 0, %s54
      %s72 = sphi 0, %s72
      %s74 = sphi 0, %s72
      %s75 = sphi 0, %s74
      %s89 = sphi 0, %s75
      %s93 = sphi 0, %s93
      %s95 = sphi 0, %s93
      %s96 = sphi 0, %s95
      %s110 = sphi 0, %s96
      %s114 = sphi 0, %s114
      %s116 = sphi 0, %s114
      %s117 = sphi 0, %s116
      %s131 = sphi 0, %s117
      %s135 = sphi 0, %s135
      %s137 = sphi 0, %s135
      %s138 = sphi 0, %s137
      %s152 = sphi 0, %s138
      %s156 = sphi 0, %s156
      %s158 = sphi 0, %s156
      %s159 = sphi 0, %s158
      %s173 = sphi 0, %s159
      %s179 = sphi 0, %s181
      %s182 = sphi 0, %s179
      %s183 = sphi 0, %s182
      %s199 = sphi 0, %s183
    $region4: #{tpu_custom_call.1} parent=1 // loop_header_branch
      %20 = sbr.rel (%p18) target = $region8
    $region5: #{tpu_custom_call.1} parent=1 // loop_body
      %s22 = ssub.s32 %s17, 1
      %s23 = ssub.s32 %s17, 2
      %s24 = sadd.s32 %s17, 1
      %s25 = ssub.s32 %s17, %s24
      %p26 = scmp.eq.s32.totalorder %s25, 0
      %s28 = sadd.s32 %s27, 1
      %s29 = scalar_select %p26, %s27, %s28
      %p32 = pneg %p26
      %p33 = scmp.eq.s32.totalorder %s17, 1
      %p34 = por %p32, %p33
      %p35 = scmp.ne.s32.totalorder %s27, %s30
      %p36 = scmp.eq.s32.totalorder %s17, 0
      %p37 = por %p35, %p36
      %p38 = scmp.ne.s32.totalorder %s27, %s30
      %p39 = scmp.eq.s32.totalorder %s22, 1
      %p40 = por %p38, %p39
      %p41 = scmp.ne.s32.totalorder %s30, %s31
      %p42 = scmp.eq.s32.totalorder %s22, 0
      %p43 = por %p41, %p42
      %p44 = scmp.ne.s32.totalorder %s30, %s31
      %p45 = scmp.eq.s32.totalorder %s23, 1
      %p46 = por %p44, %p45
      %p48 = scmp.ne.s32.totalorder %s31, %s47
      %p49 = scmp.eq.s32.totalorder %s23, 0
      %p50 = por %p48, %p49
      %s52 = sadd.s32 %s51, 1
      %p55 = scmp.eq.s32.totalorder %s17, 1
      %p56 = scmp.ne.s32.totalorder %s51, %s53
      %p57 = scmp.eq.s32.totalorder %s17, 0
      %p58 = por %p56, %p57
      %p59 = scmp.ne.s32.totalorder %s51, %s53
      %p60 = scmp.eq.s32.totalorder %s22, 1
      %p61 = por %p59, %p60
      %p62 = scmp.ne.s32.totalorder %s53, %s54
      %p63 = scmp.eq.s32.totalorder %s22, 0
      %p64 = por %p62, %p63
      %p65 = scmp.ne.s32.totalorder %s53, %s54
      %p66 = scmp.eq.s32.totalorder %s23, 1
      %p67 = por %p65, %p66
      %p69 = scmp.ne.s32.totalorder %s54, %s68
      %p70 = scmp.eq.s32.totalorder %s23, 0
      %p71 = por %p69, %p70
      %s73 = sadd.s32 %s72, 1
      %p76 = scmp.eq.s32.totalorder %s17, 1
      %p77 = scmp.ne.s32.totalorder %s72, %s74
      %p78 = scmp.eq.s32.totalorder %s17, 0
      %p79 = por %p77, %p78
      %p80 = scmp.ne.s32.totalorder %s72, %s74
      %p81 = scmp.eq.s32.totalorder %s22, 1
      %p82 = por %p80, %p81
      %p83 = scmp.ne.s32.totalorder %s74, %s75
      %p84 = scmp.eq.s32.totalorder %s22, 0
      %p85 = por %p83, %p84
      %p86 = scmp.ne.s32.totalorder %s74, %s75
      %p87 = scmp.eq.s32.totalorder %s23, 1
      %p88 = por %p86, %p87
      %p90 = scmp.ne.s32.totalorder %s75, %s89
      %p91 = scmp.eq.s32.totalorder %s23, 0
      %p92 = por %p90, %p91
      %s94 = sadd.s32 %s93, 1
      %p97 = scmp.eq.s32.totalorder %s17, 1
      %p98 = scmp.ne.s32.totalorder %s93, %s95
      %p99 = scmp.eq.s32.totalorder %s17, 0
      %p100 = por %p98, %p99
      %p101 = scmp.ne.s32.totalorder %s93, %s95
      %p102 = scmp.eq.s32.totalorder %s22, 1
      %p103 = por %p101, %p102
      %p104 = scmp.ne.s32.totalorder %s95, %s96
      %p105 = scmp.eq.s32.totalorder %s22, 0
      %p106 = por %p104, %p105
      %p107 = scmp.ne.s32.totalorder %s95, %s96
      %p108 = scmp.eq.s32.totalorder %s23, 1
      %p109 = por %p107, %p108
      %p111 = scmp.ne.s32.totalorder %s96, %s110
      %p112 = scmp.eq.s32.totalorder %s23, 0
      %p113 = por %p111, %p112
      %s115 = sadd.s32 %s114, 1
      %p118 = scmp.eq.s32.totalorder %s17, 1
      %p119 = scmp.ne.s32.totalorder %s114, %s116
      %p120 = scmp.eq.s32.totalorder %s17, 0
      %p121 = por %p119, %p120
      %p122 = scmp.ne.s32.totalorder %s114, %s116
      %p123 = scmp.eq.s32.totalorder %s22, 1
      %p124 = por %p122, %p123
      %p125 = scmp.ne.s32.totalorder %s116, %s117
      %p126 = scmp.eq.s32.totalorder %s22, 0
      %p127 = por %p125, %p126
      %p128 = scmp.ne.s32.totalorder %s116, %s117
      %p129 = scmp.eq.s32.totalorder %s23, 1
      %p130 = por %p128, %p129
      %p132 = scmp.ne.s32.totalorder %s117, %s131
      %p133 = scmp.eq.s32.totalorder %s23, 0
      %p134 = por %p132, %p133
      %s136 = sadd.s32 %s135, 1
      %p139 = scmp.eq.s32.totalorder %s17, 1
      %p140 = scmp.ne.s32.totalorder %s135, %s137
      %p141 = scmp.eq.s32.totalorder %s17, 0
      %p142 = por %p140, %p141
      %p143 = scmp.ne.s32.totalorder %s135, %s137
      %p144 = scmp.eq.s32.totalorder %s22, 1
      %p145 = por %p143, %p144
      %p146 = scmp.ne.s32.totalorder %s137, %s138
      %p147 = scmp.eq.s32.totalorder %s22, 0
      %p148 = por %p146, %p147
      %p149 = scmp.ne.s32.totalorder %s137, %s138
      %p150 = scmp.eq.s32.totalorder %s23, 1
      %p151 = por %p149, %p150
      %p153 = scmp.ne.s32.totalorder %s138, %s152
      %p154 = scmp.eq.s32.totalorder %s23, 0
      %p155 = por %p153, %p154
      %s157 = sadd.s32 %s156, 1
      %p160 = scmp.eq.s32.totalorder %s17, 1
      %p161 = scmp.ne.s32.totalorder %s156, %s158
      %p162 = scmp.eq.s32.totalorder %s17, 0
      %p163 = por %p161, %p162
      %p164 = scmp.ne.s32.totalorder %s156, %s158
      %p165 = scmp.eq.s32.totalorder %s22, 1
      %p166 = por %p164, %p165
      %p167 = scmp.ne.s32.totalorder %s158, %s159
      %p168 = scmp.eq.s32.totalorder %s22, 0
      %p169 = por %p167, %p168
      %p170 = scmp.ne.s32.totalorder %s158, %s159
      %p171 = scmp.eq.s32.totalorder %s23, 1
      %p172 = por %p170, %p171
      %p174 = scmp.ne.s32.totalorder %s159, %s173
      %p175 = scmp.eq.s32.totalorder %s23, 0
      %p176 = por %p174, %p175
      %s177 = ssub.s32 %s17, %s24
      %p178 = scmp.eq.s32.totalorder %s177, 0
      %s180 = sadd.s32 %s179, 1
      %s181 = scalar_select %p178, %s179, %s180
      %p184 = pneg %p178
      %p185 = scmp.eq.s32.totalorder %s17, 1
      %p186 = por %p184, %p185
      %p187 = scmp.ne.s32.totalorder %s179, %s182
      %p188 = scmp.eq.s32.totalorder %s17, 0
      %p189 = por %p187, %p188
      %p190 = scmp.ne.s32.totalorder %s179, %s182
      %p191 = scmp.eq.s32.totalorder %s22, 1
      %p192 = por %p190, %p191
      %p193 = scmp.ne.s32.totalorder %s182, %s183
      %p194 = scmp.eq.s32.totalorder %s22, 0
      %p195 = por %p193, %p194
      %p196 = scmp.ne.s32.totalorder %s182, %s183
      %p197 = scmp.eq.s32.totalorder %s23, 1
      %p198 = por %p196, %p197
      %p200 = scmp.ne.s32.totalorder %s183, %s199
      %p201 = scmp.eq.s32.totalorder %s23, 0
      %p202 = por %p200, %p201
      %p203 = scmp.le.s32.totalorder 1, %s17
      %p204 = scmp.lt.s32.totalorder %s17, 3
      %p205 = pnand %p203, %p204
      %p206 = pneg %p205
      // Predicated region
      $region9: #{tpu_custom_call.1} parent=5 // pred_check
        _
      $region10: #{tpu_custom_call.1} parent=5 // pred_check_branch
        %208 = sbr.rel (%p205) target = $region12
      $region11: #{tpu_custom_call.1} parent=5 // pred_region
        %s209 = ssub.s32 %s17, 1
        // Predicated region
        $region13: #{tpu_custom_call.1} parent=11 // pred_check
          %p210 = pneg %p64
        $region14: #{tpu_custom_call.1} parent=11 // pred_check_branch
          %212 = sbr.rel (%p210) target = $region16
        $region15: #{tpu_custom_call.1} parent=11 // pred_region
          _
        $region16: #{tpu_custom_call.1} parent=11 // pred_fallthru
          _
        // Predicated region
        $region17: #{tpu_custom_call.1} parent=11 // pred_check
          %p213 = pneg %p85
        $region18: #{tpu_custom_call.1} parent=11 // pred_check_branch
          %215 = sbr.rel (%p213) target = $region20
        $region19: #{tpu_custom_call.1} parent=11 // pred_region
          _
        $region20: #{tpu_custom_call.1} parent=11 // pred_fallthru
          _
        // Predicated region
        $region21: #{tpu_custom_call.1} parent=11 // pred_check
          %p216 = pneg %p106
        $region22: #{tpu_custom_call.1} parent=11 // pred_check_branch
          %218 = sbr.rel (%p216) target = $region24
        $region23: #{tpu_custom_call.1} parent=11 // pred_region
          _
        $region24: #{tpu_custom_call.1} parent=11 // pred_fallthru
          _
        // Predicated region
        $region25: #{tpu_custom_call.1} parent=11 // pred_check
          %p219 = pneg %p127
        $region26: #{tpu_custom_call.1} parent=11 // pred_check_branch
          %221 = sbr.rel (%p219) target = $region28
        $region27: #{tpu_custom_call.1} parent=11 // pred_region
          _
        $region28: #{tpu_custom_call.1} parent=11 // pred_fallthru
          _
        // Predicated region
        $region29: #{tpu_custom_call.1} parent=11 // pred_check
          %p222 = pneg %p148
        $region30: #{tpu_custom_call.1} parent=11 // pred_check_branch
          %224 = sbr.rel (%p222) target = $region32
        $region31: #{tpu_custom_call.1} parent=11 // pred_region
          _
        $region32: #{tpu_custom_call.1} parent=11 // pred_fallthru
          _
        // Predicated region
        $region33: #{tpu_custom_call.1} parent=11 // pred_check
          %p225 = pneg %p169
        $region34: #{tpu_custom_call.1} parent=11 // pred_check_branch
          %227 = sbr.rel (%p225) target = $region36
        $region35: #{tpu_custom_call.1} parent=11 // pred_region
          _
        $region36: #{tpu_custom_call.1} parent=11 // pred_fallthru
          _
      $region12: #{tpu_custom_call.1} parent=5 // pred_fallthru
        _
      %p228 = scmp.lt.s32.totalorder %s17, 2
      // Predicated region
      $region37: #{tpu_custom_call.1} parent=5 // pred_check
        %p229 = pneg %p228
      $region38: #{tpu_custom_call.1} parent=5 // pred_check_branch
        %231 = sbr.rel (%p229) target = $region40
      $region39: #{tpu_custom_call.1} parent=5 // pred_region
        // Predicated region
        $region41: #{tpu_custom_call.1} parent=39 // pred_check
          %p232 = pneg %p37
        $region42: #{tpu_custom_call.1} parent=39 // pred_check_branch
          %234 = sbr.rel (%p232) target = $region44
        $region43: #{tpu_custom_call.1} parent=39 // pred_region
          %s235 = smul.u32 2, %s17
          %p236 = scmp.lt.s32.totalorder %s235, 3
          %s237 = scalar_select %p236, %s235, 3
          %s238 = smul.addr %s237, 4
          %s239 = scalar_lea.vmem %s0, %s238
          %s240 = smul.u32 2, %s17
        $region44: #{tpu_custom_call.1} parent=39 // pred_fallthru
          _
      $region40: #{tpu_custom_call.1} parent=5 // pred_fallthru
        _
      %p241 = scmp.le.s32.totalorder 1, %s17
      %p242 = scmp.lt.s32.totalorder %s17, 3
      %p243 = pnand %p241, %p242
      %p244 = pneg %p243
      // Predicated region
      $region45: #{tpu_custom_call.1} parent=5 // pred_check
        _
      $region46: #{tpu_custom_call.1} parent=5 // pred_check_branch
        %246 = sbr.rel (%p243) target = $region48
      $region47: #{tpu_custom_call.1} parent=5 // pred_region
        %s247 = ssub.s32 %s17, 1
        %s248 = smul.u32 2, %s22
        %p249 = scmp.lt.s32.totalorder %s248, 3
        %s250 = scalar_select %p249, %s248, 3
        %s251 = smul.addr %s250, 4
        %s252 = scalar_lea.vmem %s0, %s251
        %p253 = pneg %p43
        %p254 = pneg %p40
        %p255 = pneg %p64
        %p256 = pneg %p61
        %p257 = pneg %p85
        %p258 = pneg %p82
        %p259 = pneg %p106
        %p260 = pneg %p103
        %p261 = pneg %p127
        %p262 = pneg %p124
        %p263 = pneg %p148
        %p264 = pneg %p145
        %p265 = pneg %p169
        %p266 = pneg %p166
        %p267 = pneg %p195
        %p268 = pneg %p192
        %s269 = sand.u32 %s182, 1
        %s270 = scalar_lea.sflag [#allocation4], %s269
        %s271 = sand.u32 %s182, 1
        %s272 = smul.addr %s271, 2
        %s273 = scalar_lea.vmem [#allocation3], %s272
        %s274 = smul.u32 2, %s22
        %p275 = scmp.lt.s32.totalorder %s274, 3
        %s276 = scalar_select %p275, %s274, 3
        %s277 = smul.addr %s276, 4
        %s278 = scalar_lea.vmem %s0, %s277
        %s279 = smul.u32 2, %s22
        %s280 = smul.u32 2, %s22
        %v282 = vld [vmem:[%s278] sm:$0x77]
        %v283 = vld [vmem:[%s1] sm:$0xff]
        %v284 = vld [vmem:[%s1 + $0x8] sm:$0xff]
        %v285 = vld [vmem:[%s1 + $0x10] sm:$0xff]
        %v286 = vld [vmem:[%s1 + $0x18] sm:$0xff]
        %v287 = vld [vmem:[%s1 + $0x20] sm:$0xff]
        %v288 = vld [vmem:[%s1 + $0x28] sm:$0xff]
        %v289 = vld [vmem:[%s1 + $0x30] sm:$0xff]
        %v290 = vld [vmem:[%s1 + $0x38] sm:$0xff]
        %292 = vset.pattern.permute.xlu0 0
        %293 = vperm.xlu0 %292, %v283
        %v294 = vpop.permute.xlu0 %293
        %297 = vset.pattern.permute.xlu0 0
        %298 = vperm.xlu0 %297, %v284
        %v299 = vpop.permute.xlu0 %298
        %302 = vset.pattern.permute.xlu0 0
        %303 = vperm.xlu0 %302, %v285
        %v304 = vpop.permute.xlu0 %303
        %307 = vset.pattern.permute.xlu0 0
        %308 = vperm.xlu0 %307, %v286
        %v309 = vpop.permute.xlu0 %308
        %312 = vset.pattern.permute.xlu0 0
        %313 = vperm.xlu0 %312, %v287
        %v314 = vpop.permute.xlu0 %313
        %317 = vset.pattern.permute.xlu0 0
        %318 = vperm.xlu0 %317, %v288
        %v319 = vpop.permute.xlu0 %318
        %322 = vset.pattern.permute.xlu0 0
        %323 = vperm.xlu0 %322, %v289
        %v324 = vpop.permute.xlu0 %323
        %327 = vset.pattern.permute.xlu0 0
        %328 = vperm.xlu0 %327, %v290
        %v329 = vpop.permute.xlu0 %328
        %v332 = vlaneseq
        %v333 = vshrl.u32 %v332, 7
        %v334 = vsub.s32 0, %v333
        %v335 = vrot.slane %v282, %v334
        %v336 = vlaneseq
        %v337 = vshrl.u32 %v336, 7
        %v338 = vsub.s32 4, %v337
        %v339 = vrot.slane %v282, %v338
        %v342 = vlaneseq
        %v343 = vshrl.u32 %v342, 7
        %v344 = vsub.s32 0, %v343
        %v345 = vrot.slane %v335, %v344
        %v346 = vlaneseq
        %v347 = vshrl.u32 %v346, 7
        %v348 = vsub.s32 0, %v347
        %v349 = vrot.slane %v339, %v348
        %v350 = vmul.f32 %v294, %v345
        %v351 = vmul.f32 %v294, %v349
        %v352 = vmul.f32 %v299, %v345
        %v353 = vmul.f32 %v299, %v349
        %v354 = vmul.f32 %v304, %v345
        %v355 = vmul.f32 %v304, %v349
        %v356 = vmul.f32 %v309, %v345
        %v357 = vmul.f32 %v309, %v349
        %v358 = vmul.f32 %v314, %v345
        %v359 = vmul.f32 %v314, %v349
        %v360 = vmul.f32 %v319, %v345
        %v361 = vmul.f32 %v319, %v349
        %v362 = vmul.f32 %v324, %v345
        %v363 = vmul.f32 %v324, %v349
        %v364 = vmul.f32 %v329, %v345
        %v365 = vmul.f32 %v329, %v349
        %366 = vset.pattern.permute.xlu0 1
        %367 = vperm.xlu0 %366, %v283
        %v368 = vpop.permute.xlu0 %367
        %370 = vset.pattern.permute.xlu0 1
        %371 = vperm.xlu0 %370, %v284
        %v372 = vpop.permute.xlu0 %371
        %374 = vset.pattern.permute.xlu0 1
        %375 = vperm.xlu0 %374, %v285
        %v376 = vpop.permute.xlu0 %375
        %378 = vset.pattern.permute.xlu0 1
        %379 = vperm.xlu0 %378, %v286
        %v380 = vpop.permute.xlu0 %379
        %382 = vset.pattern.permute.xlu0 1
        %383 = vperm.xlu0 %382, %v287
        %v384 = vpop.permute.xlu0 %383
        %386 = vset.pattern.permute.xlu0 1
        %387 = vperm.xlu0 %386, %v288
        %v388 = vpop.permute.xlu0 %387
        %390 = vset.pattern.permute.xlu0 1
        %391 = vperm.xlu0 %390, %v289
        %v392 = vpop.permute.xlu0 %391
        %394 = vset.pattern.permute.xlu0 1
        %395 = vperm.xlu0 %394, %v290
        %v396 = vpop.permute.xlu0 %395
        %v398 = vlaneseq
        %v399 = vshrl.u32 %v398, 7
        %v400 = vsub.s32 1, %v399
        %v401 = vrot.slane %v282, %v400
        %v402 = vlaneseq
        %v403 = vshrl.u32 %v402, 7
        %v404 = vsub.s32 5, %v403
        %v405 = vrot.slane %v282, %v404
        %v408 = vlaneseq
        %v409 = vshrl.u32 %v408, 7
        %v410 = vsub.s32 1, %v409
        %v411 = vrot.slane %v401, %v410
        %v412 = vlaneseq
        %v413 = vshrl.u32 %v412, 7
        %v414 = vsub.s32 1, %v413
        %v415 = vrot.slane %v405, %v414
        %v416 = vmul.f32 %v368, %v411
        %v417 = vmul.f32 %v368, %v415
        %v418 = vmul.f32 %v372, %v411
        %v419 = vmul.f32 %v372, %v415
        %v420 = vmul.f32 %v376, %v411
        %v421 = vmul.f32 %v376, %v415
        %v422 = vmul.f32 %v380, %v411
        %v423 = vmul.f32 %v380, %v415
        %v424 = vmul.f32 %v384, %v411
        %v425 = vmul.f32 %v384, %v415
        %v426 = vmul.f32 %v388, %v411
        %v427 = vmul.f32 %v388, %v415
        %v428 = vmul.f32 %v392, %v411
        %v429 = vmul.f32 %v392, %v415
        %v430 = vmul.f32 %v396, %v411
        %v431 = vmul.f32 %v396, %v415
        %v432 = vadd.f32 %v350, %v416
        %v433 = vadd.f32 %v351, %v417
        %v434 = vadd.f32 %v352, %v418
        %v435 = vadd.f32 %v353, %v419
        %v436 = vadd.f32 %v354, %v420
        %v437 = vadd.f32 %v355, %v421
        %v438 = vadd.f32 %v356, %v422
        %v439 = vadd.f32 %v357, %v423
        %v440 = vadd.f32 %v358, %v424
        %v441 = vadd.f32 %v359, %v425
        %v442 = vadd.f32 %v360, %v426
        %v443 = vadd.f32 %v361, %v427
        %v444 = vadd.f32 %v362, %v428
        %v445 = vadd.f32 %v363, %v429
        %v446 = vadd.f32 %v364, %v430
        %v447 = vadd.f32 %v365, %v431
        %448 = vset.pattern.permute.xlu0 2
        %449 = vperm.xlu0 %448, %v283
        %v450 = vpop.permute.xlu0 %449
        %452 = vset.pattern.permute.xlu0 2
        %453 = vperm.xlu0 %452, %v284
        %v454 = vpop.permute.xlu0 %453
        %456 = vset.pattern.permute.xlu0 2
        %457 = vperm.xlu0 %456, %v285
        %v458 = vpop.permute.xlu0 %457
        %460 = vset.pattern.permute.xlu0 2
        %461 = vperm.xlu0 %460, %v286
        %v462 = vpop.permute.xlu0 %461
        %464 = vset.pattern.permute.xlu0 2
        %465 = vperm.xlu0 %464, %v287
        %v466 = vpop.permute.xlu0 %465
        %468 = vset.pattern.permute.xlu0 2
        %469 = vperm.xlu0 %468, %v288
        %v470 = vpop.permute.xlu0 %469
        %472 = vset.pattern.permute.xlu0 2
        %473 = vperm.xlu0 %472, %v289
        %v474 = vpop.permute.xlu0 %473
        %476 = vset.pattern.permute.xlu0 2
        %477 = vperm.xlu0 %476, %v290
        %v478 = vpop.permute.xlu0 %477
        %v480 = vlaneseq
        %v481 = vshrl.u32 %v480, 7
        %v482 = vsub.s32 2, %v481
        %v483 = vrot.slane %v282, %v482
        %v484 = vlaneseq
        %v485 = vshrl.u32 %v484, 7
        %v486 = vsub.s32 6, %v485
        %v487 = vrot.slane %v282, %v486
        %v490 = vlaneseq
        %v491 = vshrl.u32 %v490, 7
        %v492 = vsub.s32 2, %v491
        %v493 = vrot.slane %v483, %v492
        %v494 = vlaneseq
        %v495 = vshrl.u32 %v494, 7
        %v496 = vsub.s32 2, %v495
        %v497 = vrot.slane %v487, %v496
        %v498 = vmul.f32 %v450, %v493
        %v499 = vmul.f32 %v450, %v497
        %v500 = vmul.f32 %v454, %v493
        %v501 = vmul.f32 %v454, %v497
        %v502 = vmul.f32 %v458, %v493
        %v503 = vmul.f32 %v458, %v497
        %v504 = vmul.f32 %v462, %v493
        %v505 = vmul.f32 %v462, %v497
        %v506 = vmul.f32 %v466, %v493
        %v507 = vmul.f32 %v466, %v497
        %v508 = vmul.f32 %v470, %v493
        %v509 = vmul.f32 %v470, %v497
        %v510 = vmul.f32 %v474, %v493
        %v511 = vmul.f32 %v474, %v497
        %v512 = vmul.f32 %v478, %v493
        %v513 = vmul.f32 %v478, %v497
        %v514 = vadd.f32 %v432, %v498
        %v515 = vadd.f32 %v433, %v499
        %v516 = vadd.f32 %v434, %v500
        %v517 = vadd.f32 %v435, %v501
        %v518 = vadd.f32 %v436, %v502
        %v519 = vadd.f32 %v437, %v503
        %v520 = vadd.f32 %v438, %v504
        %v521 = vadd.f32 %v439, %v505
        %v522 = vadd.f32 %v440, %v506
        %v523 = vadd.f32 %v441, %v507
        %v524 = vadd.f32 %v442, %v508
        %v525 = vadd.f32 %v443, %v509
        %v526 = vadd.f32 %v444, %v510
        %v527 = vadd.f32 %v445, %v511
        %v528 = vadd.f32 %v446, %v512
        %v529 = vadd.f32 %v447, %v513
        %v530 = vld [vmem:[%s2] sm:$0xff]
        %v531 = vld [vmem:[%s2 + $0x8] sm:$0xff]
        %v532 = vld [vmem:[%s2 + $0x10] sm:$0xff]
        %v533 = vld [vmem:[%s2 + $0x18] sm:$0xff]
        %v534 = vld [vmem:[%s2 + $0x20] sm:$0xff]
        %v535 = vld [vmem:[%s2 + $0x28] sm:$0xff]
        %v536 = vld [vmem:[%s2 + $0x30] sm:$0xff]
        %v537 = vld [vmem:[%s2 + $0x38] sm:$0xff]
        %539 = vset.pattern.permute.xlu0 0
        %540 = vperm.xlu0 %539, %v530
        %v541 = vpop.permute.xlu0 %540
        %544 = vset.pattern.permute.xlu0 0
        %545 = vperm.xlu0 %544, %v531
        %v546 = vpop.permute.xlu0 %545
        %549 = vset.pattern.permute.xlu0 0
        %550 = vperm.xlu0 %549, %v532
        %v551 = vpop.permute.xlu0 %550
        %554 = vset.pattern.permute.xlu0 0
        %555 = vperm.xlu0 %554, %v533
        %v556 = vpop.permute.xlu0 %555
        %559 = vset.pattern.permute.xlu0 0
        %560 = vperm.xlu0 %559, %v534
        %v561 = vpop.permute.xlu0 %560
        %564 = vset.pattern.permute.xlu0 0
        %565 = vperm.xlu0 %564, %v535
        %v566 = vpop.permute.xlu0 %565
        %569 = vset.pattern.permute.xlu0 0
        %570 = vperm.xlu0 %569, %v536
        %v571 = vpop.permute.xlu0 %570
        %574 = vset.pattern.permute.xlu0 0
        %575 = vperm.xlu0 %574, %v537
        %v576 = vpop.permute.xlu0 %575
        %v578 = vadd.f32 %v514, %v541
        %v579 = vadd.f32 %v515, %v541
        %v580 = vadd.f32 %v516, %v546
        %v581 = vadd.f32 %v517, %v546
        %v582 = vadd.f32 %v518, %v551
        %v583 = vadd.f32 %v519, %v551
        %v584 = vadd.f32 %v520, %v556
        %v585 = vadd.f32 %v521, %v556
        %v586 = vadd.f32 %v522, %v561
        %v587 = vadd.f32 %v523, %v561
        %v588 = vadd.f32 %v524, %v566
        %v589 = vadd.f32 %v525, %v566
        %v590 = vadd.f32 %v526, %v571
        %v591 = vadd.f32 %v527, %v571
        %v592 = vadd.f32 %v528, %v576
        %v593 = vadd.f32 %v529, %v576
        %v594 = vmul.f32 %v578, 0.01
        %v595 = vmul.f32 %v579, 0.01
        %v596 = vmul.f32 %v580, 0.01
        %v597 = vmul.f32 %v581, 0.01
        %v598 = vmul.f32 %v582, 0.01
        %v599 = vmul.f32 %v583, 0.01
        %v600 = vmul.f32 %v584, 0.01
        %v601 = vmul.f32 %v585, 0.01
        %v602 = vmul.f32 %v586, 0.01
        %v603 = vmul.f32 %v587, 0.01
        %v604 = vmul.f32 %v588, 0.01
        %v605 = vmul.f32 %v589, 0.01
        %v606 = vmul.f32 %v590, 0.01
        %v607 = vmul.f32 %v591, 0.01
        %v608 = vmul.f32 %v592, 0.01
        %v609 = vmul.f32 %v593, 0.01
        %v610 = vmax.f32 %v578, %v594
        %v611 = vmax.f32 %v579, %v595
        %v612 = vmax.f32 %v580, %v596
        %v613 = vmax.f32 %v581, %v597
        %v614 = vmax.f32 %v582, %v598
        %v615 = vmax.f32 %v583, %v599
        %v616 = vmax.f32 %v584, %v600
        %v617 = vmax.f32 %v585, %v601
        %v618 = vmax.f32 %v586, %v602
        %v619 = vmax.f32 %v587, %v603
        %v620 = vmax.f32 %v588, %v604
        %v621 = vmax.f32 %v589, %v605
        %v622 = vmax.f32 %v590, %v606
        %v623 = vmax.f32 %v591, %v607
        %v624 = vmax.f32 %v592, %v608
        %v625 = vmax.f32 %v593, %v609
        %v626 = vld [vmem:[%s3] sm:$0xff]
        %v627 = vld [vmem:[%s3 + $0x8] sm:$0xff]
        %v628 = vld [vmem:[%s3 + $0x10] sm:$0xff]
        %v629 = vld [vmem:[%s3 + $0x18] sm:$0xff]
        %v630 = vld [vmem:[%s3 + $0x20] sm:$0xff]
        %v631 = vld [vmem:[%s3 + $0x28] sm:$0xff]
        %v632 = vld [vmem:[%s3 + $0x30] sm:$0xff]
        %v633 = vld [vmem:[%s3 + $0x38] sm:$0xff]
        %v634 = vpack.c.bf16 %v627, %v626
        %v635 = vpack.c.bf16 %v629, %v628
        %v636 = vpack.c.bf16 %v631, %v630
        %v637 = vpack.c.bf16 %v633, %v632
        %v638 = vpack.c.bf16 %v612, %v610
        %v639 = vpack.c.bf16 %v613, %v611
        %v640 = vpack.c.bf16 %v616, %v614
        %v641 = vpack.c.bf16 %v617, %v615
        %v642 = vpack.c.bf16 %v620, %v618
        %v643 = vpack.c.bf16 %v621, %v619
        %v644 = vpack.c.bf16 %v624, %v622
        %v645 = vpack.c.bf16 %v625, %v623
        %v646 = vld [vmem:[%s4] sm:$0xff]
        %v647 = vld [vmem:[%s4 + $0x8] sm:$0xff]
        %v648 = vld [vmem:[%s4 + $0x10] sm:$0xff]
        %v649 = vld [vmem:[%s4 + $0x18] sm:$0xff]
        %v650 = vld [vmem:[%s4 + $0x20] sm:$0xff]
        %v651 = vld [vmem:[%s4 + $0x28] sm:$0xff]
        %v652 = vld [vmem:[%s4 + $0x30] sm:$0xff]
        %v653 = vld [vmem:[%s4 + $0x38] sm:$0xff]
        %655 = vset.pattern.permute.xlu0 0
        %656 = vperm.xlu0 %655, %v646
        %v657 = vpop.permute.xlu0 %656
        %660 = vset.pattern.permute.xlu0 0
        %661 = vperm.xlu0 %660, %v647
        %v662 = vpop.permute.xlu0 %661
        %665 = vset.pattern.permute.xlu0 0
        %666 = vperm.xlu0 %665, %v648
        %v667 = vpop.permute.xlu0 %666
        %670 = vset.pattern.permute.xlu0 0
        %671 = vperm.xlu0 %670, %v649
        %v672 = vpop.permute.xlu0 %671
        %675 = vset.pattern.permute.xlu0 0
        %676 = vperm.xlu0 %675, %v650
        %v677 = vpop.permute.xlu0 %676
        %680 = vset.pattern.permute.xlu0 0
        %681 = vperm.xlu0 %680, %v651
        %v682 = vpop.permute.xlu0 %681
        %685 = vset.pattern.permute.xlu0 0
        %686 = vperm.xlu0 %685, %v652
        %v687 = vpop.permute.xlu0 %686
        %690 = vset.pattern.permute.xlu0 0
        %691 = vperm.xlu0 %690, %v653
        %v692 = vpop.permute.xlu0 %691
        %vm694 = vcmask 523264
        %v696 = vsel %vm694, %v634, 0
        %v699 = vsel %vm694, %v635, 0
        %v702 = vsel %vm694, %v636, 0
        %v705 = vsel %vm694, %v637, 0
        %707 = vmatprep.subr.bf16.mxu0 %v639
        %708 = vmatpush1.bf16.msra.mxu0 %v638
        %709 = vmatprep.subr.bf16.mxu0 %v641
        %710 = vmatpush1.bf16.msra.mxu0 %v640
        %711 = vmatprep.subr.bf16.mxu0 %v643
        %712 = vmatpush1.bf16.msra.mxu0 %v642
        %713 = vmatprep.subr.bf16.mxu0 %v645
        %714 = vmatpush1.bf16.msra.mxu0 %v644
        %715 = vmatprep.subr.bf16.mxu0 0
        %716 = vmatpush1.bf16.msra.mxu0 0
        %717 = vmatprep.subr.bf16.mxu0 0
        %718 = vmatpush1.bf16.msra.mxu0 0
        %719 = vmatprep.subr.bf16.mxu0 0
        %720 = vmatpush1.bf16.msra.mxu0 0
        %721 = vmatprep.subr.bf16.mxu0 0
        %722 = vmatpush1.bf16.msra.mxu0 0
        %723 = vmatprep.subr.bf16.mxu0 0
        %724 = vmatpush1.bf16.msra.mxu0 0
        %725 = vmatprep.subr.bf16.mxu0 0
        %726 = vmatpush1.bf16.msra.mxu0 0
        %727 = vmatprep.subr.bf16.mxu0 0
        %728 = vmatpush1.bf16.msra.mxu0 0
        %729 = vmatprep.subr.bf16.mxu0 0
        %730 = vmatpush1.bf16.msra.mxu0 0
        %731 = vmatprep.subr.bf16.mxu0 0
        %732 = vmatpush1.bf16.msra.mxu0 0
        %733 = vmatprep.subr.bf16.mxu0 0
        %734 = vmatpush1.bf16.msra.mxu0 0
        %735 = vmatprep.subr.bf16.mxu0 0
        %736 = vmatpush1.bf16.msra.mxu0 0
        %737 = vmatprep.subr.bf16.mxu0 0
        %738 = vmatpush1.bf16.msra.mxu0 0
        %739 = vmatprep.mubr.bf16.mxu0 0
        %740 = vmatmul.mubr.bf16.gmra.mrb[0].mxu0 %v696
        %v741 = vpop.f32.mrb[0].mxu0
        %v742 = vadd.f32 %v657, %v741
        %v743 = vpop.f32.mrb[0].mxu0
        %v744 = vadd.f32 %v657, %v743
        %v745 = vpop.f32.mrb[0].mxu0
        %v746 = vadd.f32 %v662, %v745
        %v747 = vpop.f32.mrb[0].mxu0
        %v748 = vadd.f32 %v662, %v747
        %749 = vmatprep.mubr.bf16.mxu0 0
        %750 = vmatmul.mubr.bf16.gmra.mrb[0].mxu0 %v699
        %v751 = vpop.f32.mrb[0].mxu0
        %v752 = vadd.f32 %v667, %v751
        %v753 = vpop.f32.mrb[0].mxu0
        %v754 = vadd.f32 %v667, %v753
        %v755 = vpop.f32.mrb[0].mxu0
        %v756 = vadd.f32 %v672, %v755
        %v757 = vpop.f32.mrb[0].mxu0
        %v758 = vadd.f32 %v672, %v757
        %759 = vmatprep.mubr.bf16.mxu0 0
        %760 = vmatmul.mubr.bf16.gmra.mrb[0].mxu0 %v702
        %v761 = vpop.f32.mrb[0].mxu0
        %v762 = vadd.f32 %v677, %v761
        %v763 = vpop.f32.mrb[0].mxu0
        %v764 = vadd.f32 %v677, %v763
        %v765 = vpop.f32.mrb[0].mxu0
        %v766 = vadd.f32 %v682, %v765
        %v767 = vpop.f32.mrb[0].mxu0
        %v768 = vadd.f32 %v682, %v767
        %769 = vmatprep.mubr.bf16.mxu0 0
        %770 = vmatmul.mubr.bf16.gmra.mrb[0].mxu0 %v705
        %v771 = vpop.f32.mrb[0].mxu0
        %v772 = vadd.f32 %v687, %v771
        %v773 = vpop.f32.mrb[0].mxu0
        %v774 = vadd.f32 %v687, %v773
        %v775 = vpop.f32.mrb[0].mxu0
        %v776 = vadd.f32 %v692, %v775
        %v777 = vpop.f32.mrb[0].mxu0
        %v778 = vadd.f32 %v692, %v777
        %779 = vdwg.mxu0
        %v780 = vmul.f32 %v742, 0.01
        %v781 = vmul.f32 %v744, 0.01
        %v782 = vmul.f32 %v746, 0.01
        %v783 = vmul.f32 %v748, 0.01
        %v784 = vmul.f32 %v752, 0.01
        %v785 = vmul.f32 %v754, 0.01
        %v786 = vmul.f32 %v756, 0.01
        %v787 = vmul.f32 %v758, 0.01
        %v788 = vmul.f32 %v762, 0.01
        %v789 = vmul.f32 %v764, 0.01
        %v790 = vmul.f32 %v766, 0.01
        %v791 = vmul.f32 %v768, 0.01
        %v792 = vmul.f32 %v772, 0.01
        %v793 = vmul.f32 %v774, 0.01
        %v794 = vmul.f32 %v776, 0.01
        %v795 = vmul.f32 %v778, 0.01
        %v796 = vmax.f32 %v742, %v780
        %v797 = vmax.f32 %v744, %v781
        %v798 = vmax.f32 %v746, %v782
        %v799 = vmax.f32 %v748, %v783
        %v800 = vmax.f32 %v752, %v784
        %v801 = vmax.f32 %v754, %v785
        %v802 = vmax.f32 %v756, %v786
        %v803 = vmax.f32 %v758, %v787
        %v804 = vmax.f32 %v762, %v788
        %v805 = vmax.f32 %v764, %v789
        %v806 = vmax.f32 %v766, %v790
        %v807 = vmax.f32 %v768, %v791
        %v808 = vmax.f32 %v772, %v792
        %v809 = vmax.f32 %v774, %v793
        %v810 = vmax.f32 %v776, %v794
        %v811 = vmax.f32 %v778, %v795
        %v812 = vld [vmem:[%s5] sm:$0x1]
        %v813 = vpack.c.bf16 %v812, %v812
        %v814 = vpack.c.bf16 %v798, %v796
        %v815 = vpack.c.bf16 %v799, %v797
        %v816 = vpack.c.bf16 %v802, %v800
        %v817 = vpack.c.bf16 %v803, %v801
        %v818 = vpack.c.bf16 %v806, %v804
        %v819 = vpack.c.bf16 %v807, %v805
        %v820 = vpack.c.bf16 %v810, %v808
        %v821 = vpack.c.bf16 %v811, %v809
        %s822 = sld [smem:[#allocation2]]
        %v823 = vstv %s822
        %v825 = vsel %vm694, %v813, 0
        %827 = vmatprep.subr.bf16.mxu0 %v815
        %828 = vmatpush1.bf16.msra.mxu0 %v814
        %829 = vmatprep.subr.bf16.mxu0 %v817
        %830 = vmatpush1.bf16.msra.mxu0 %v816
        %831 = vmatprep.subr.bf16.mxu0 %v819
        %832 = vmatpush1.bf16.msra.mxu0 %v818
        %833 = vmatprep.subr.bf16.mxu0 %v821
        %834 = vmatpush1.bf16.msra.mxu0 %v820
        %835 = vmatprep.subr.bf16.mxu0 0
        %836 = vmatpush1.bf16.msra.mxu0 0
        %837 = vmatprep.subr.bf16.mxu0 0
        %838 = vmatpush1.bf16.msra.mxu0 0
        %839 = vmatprep.subr.bf16.mxu0 0
        %840 = vmatpush1.bf16.msra.mxu0 0
        %841 = vmatprep.subr.bf16.mxu0 0
        %842 = vmatpush1.bf16.msra.mxu0 0
        %843 = vmatprep.subr.bf16.mxu0 0
        %844 = vmatpush1.bf16.msra.mxu0 0
        %845 = vmatprep.subr.bf16.mxu0 0
        %846 = vmatpush1.bf16.msra.mxu0 0
        %847 = vmatprep.subr.bf16.mxu0 0
        %848 = vmatpush1.bf16.msra.mxu0 0
        %849 = vmatprep.subr.bf16.mxu0 0
        %850 = vmatpush1.bf16.msra.mxu0 0
        %851 = vmatprep.subr.bf16.mxu0 0
        %852 = vmatpush1.bf16.msra.mxu0 0
        %853 = vmatprep.subr.bf16.mxu0 0
        %854 = vmatpush1.bf16.msra.mxu0 0
        %855 = vmatprep.subr.bf16.mxu0 0
        %856 = vmatpush1.bf16.msra.mxu0 0
        %857 = vmatprep.subr.bf16.mxu0 0
        %858 = vmatpush1.bf16.msra.mxu0 0
        %859 = vmatprep.mubr.bf16.mxu0 0
        %860 = vmatmul.mubr.bf16.gmra.mrb[0].mxu0 %v825
        %v861 = vpop.f32.mrb[0].mxu0
        %v862 = vadd.f32 %v823, %v861
        %v863 = vpop.f32.mrb[0].mxu0
        %v864 = vadd.f32 %v823, %v863
        %v865 = vpop.f32.mrb[0].mxu0
        %v866 = vpop.f32.mrb[0].mxu0
        %867 = vdwg.mxu0
        %v868 = vsub.f32 0.0, %v862
        %v869 = vsub.f32 0.0, %v864
        %v870 = vmul.f32 %v868, 1.442695
        %v871 = vpow.pop %v870
        %v872 = vmul.f32 %v869, 1.442695
        %v873 = vpow.pop %v872
        %v874 = vadd.f32 %v871, 1.0
        %v875 = vadd.f32 %v873, 1.0
        %v876 = vrcp.pop %v874
        %v877 = vrcp.pop %v875
        %v880 = vcombine.low %v876, %v877
        %v882 = vunpack.c.l.s4 1966171168
        %v883 = vunpack.c.0.s8 %v882
        %v884 = vlaneseq
        %v885 = vshrl.u32 %v884, 7
        %v886 = vsub.s32 %v883, %v885
        %v887 = vrot.slane %v880, %v886
        %v889 = vunpack.c.l.s4 1966171168
        %v890 = vunpack.c.0.s8 %v889
        %v891 = vlaneseq
        %v892 = vshrl.u32 %v891, 7
        %v893 = vsub.s32 %v890, %v892
        %v894 = vrot.slane %v887, %v893
        %v896 = vlaneseq
        %vm897 = vcmp.ge.s32.totalorder %v896, 0
        %vm898 = vcmp.lt.s32.totalorder %v896, 256
        %vm899 = vmand %vm897, %vm898
        %900 = vst.msk [vmem:[%s273] sm:$0x3] %vm899, %v894
        %s901 = sand.u32 %s182, 1
        %s902 = scalar_lea.sflag [#allocation4], %s901
        %s903 = sand.u32 %s182, 1
        %s904 = smul.addr %s903, 2
        %s905 = scalar_lea.vmem [#allocation3], %s904
        // Predicated region
        $region49: #{tpu_custom_call.1} parent=47 // pred_check
          %p906 = pneg %p192
        $region50: #{tpu_custom_call.1} parent=47 // pred_check_branch
          %908 = sbr.rel (%p906) target = $region52
        $region51: #{tpu_custom_call.1} parent=47 // pred_region
          %s909 = smul.u32 2, %s22
          %s911 = ssub.s32 32, 32
          %912 = vsyncadd %s902, %s911
          %s913 = smul.addr %s909, 16
          %s914 = scalar_lea.hbm %s7, %s913
          %s916 = sshll.u32 %s905, 4
          %s917 = int_to_ptr.vmem [resolvable:$true] %s916
          %919 = dma.vmem_to_hbm [thread:$0]  %s917, 32, %s914, %s902
        $region52: #{tpu_custom_call.1} parent=47 // pred_fallthru
          _
      $region48: #{tpu_custom_call.1} parent=5 // pred_fallthru
        _
      %p920 = scmp.le.s32.totalorder 2, %s17
      // Predicated region
      $region53: #{tpu_custom_call.1} parent=5 // pred_check
        %p921 = pneg %p920
      $region54: #{tpu_custom_call.1} parent=5 // pred_check_branch
        %923 = sbr.rel (%p921) target = $region56
      $region55: #{tpu_custom_call.1} parent=5 // pred_region
        %s924 = ssub.s32 %s17, 2
        // Predicated region
        $region57: #{tpu_custom_call.1} parent=55 // pred_check
          %p925 = pneg %p198
        $region58: #{tpu_custom_call.1} parent=55 // pred_check_branch
          %927 = sbr.rel (%p925) target = $region60
        $region59: #{tpu_custom_call.1} parent=55 // pred_region
          %s928 = sand.u32 %s183, 1
          %s929 = scalar_lea.sflag [#allocation4], %s928
          %s930 = sand.u32 %s183, 1
          %s931 = smul.addr %s930, 2
          %s932 = scalar_lea.vmem [#allocation3], %s931
          %933 = dma.done %s929, 32
        $region60: #{tpu_custom_call.1} parent=55 // pred_fallthru
          _
      $region56: #{tpu_custom_call.1} parent=5 // pred_fallthru
        _
    $region6: #{tpu_custom_call.1} parent=1 // loop_footer
      %s21 = sadd.s32 1, %s17
    $region7: #{tpu_custom_call.1} parent=1 // loop_footer_branch
      %16 = sbr.rel target = $region3
    $region8: #{tpu_custom_call.1} parent=1 // loop_exit
      _
    %934 = vsyncpa [#allocation4], 1
    %s935 = scalar_lea.sflag [#allocation4], 1
    %936 = vsyncpa %s935, 1

</llo_original>
